<compile_context>
chip_gen: v7x
topology: tpu7x:2x2x1
jax: 0.10.0
libtpu: 0.0.40
codegen_flags: <defaults>
</compile_context>

<pallas_src>
import jax
import jax.numpy as jnp
from jax.experimental import pallas as pl
from jax.experimental.pallas import tpu as pltpu


_SMALL_WORKING_SET_BYTES = 8 * 1024 * 1024   # single-invocation path budget
_VMEM_LIMIT_BYTES = 32 * 1024 * 1024         # safe scoped-VMEM cap on v5e/v6e/v7x


# ---------------------------------------------------------------------------
# Path 1: gridless fused kernel for small working sets.
# ---------------------------------------------------------------------------
def _make_fused_kernel(is_relu):
    def kernel(x_ref, adj_ref, w_ref, b_ref, o_ref):
        # x_ref: (B, S, H), adj_ref: (B, S, S), w_ref: (H, H_out), b_ref: (1, H_out)
        # o_ref: (B, S, H_out)
        B = x_ref.shape[0]
        # Single batched MXU contraction for the fc (broadcasting W is a tiny
        # vreg copy; avoids a per-batch Python loop of separate dots).
        w_b = jnp.broadcast_to(w_ref[...], (B,) + w_ref.shape)
        bias = b_ref[...][None, :, :]                            # (1, 1, H_out)
        y = jnp.einsum('bsh,bho->bso', x_ref[...], w_b,
                       preferred_element_type=jnp.float32) + bias
        # Single batched MXU contraction for the adjacency bmm.
        z = jnp.einsum('bst,bto->bso', adj_ref[...], y,
                       preferred_element_type=jnp.float32)
        if is_relu:
            z = jnp.maximum(z, 0.0)
        o_ref[...] = z.astype(o_ref.dtype)                       # direct store, no flatten
    return kernel


def _gcn_fused_small(x_bm, adj_bm, w_t, b2d, is_relu):
    B, S, _ = x_bm.shape
    H_out = w_t.shape[1]
    vmem = pl.BlockSpec(memory_space=pltpu.MemorySpace.VMEM)
    return pl.pallas_call(
        _make_fused_kernel(is_relu),
        out_shape=jax.ShapeDtypeStruct((B, S, H_out), x_bm.dtype),
        in_specs=[vmem, vmem, vmem, vmem],
        out_specs=vmem,
    )(x_bm, adj_bm, w_t, b2d)


# ---------------------------------------------------------------------------
# Path 2: tiled / pipelined grid for large shapes.
# ---------------------------------------------------------------------------
def _fc_kernel(x_ref, w_ref, b_ref, y_ref):
    # x_ref: (tS, H), w_ref: (H, H_out) resident, b_ref: (1, H_out) resident,
    # y_ref: (tS, H_out)
    y_ref[...] = (jnp.dot(x_ref[...], w_ref[...],
                          preferred_element_type=jnp.float32)
                  + b_ref[...]).astype(y_ref.dtype)


def _make_bmm_kernel(is_relu):
    def kernel(adj_ref, y_ref, o_ref, acc_ref):
        # adj_ref: (tS, tT), y_ref: (tT, H_out), o_ref: (tS, H_out),
        # acc_ref: VMEM (tS, H_out) f32 accumulator
        t = pl.program_id(2)

        @pl.when(t == 0)
        def _():
            acc_ref[...] = jnp.zeros_like(acc_ref)

        acc_ref[...] += jnp.dot(adj_ref[...], y_ref[...],
                                preferred_element_type=jnp.float32)

        @pl.when(t == pl.num_programs(2) - 1)
        def _():
            z = acc_ref[...]
            if is_relu:
                z = jnp.maximum(z, 0.0)
            o_ref[...] = z.astype(o_ref.dtype)
    return kernel


def _gcn_gridded(x_bm, adj_bm, w_t, b2d, is_relu, tile):
    B, S, H = x_bm.shape
    H_out = w_t.shape[1]
    tS = tT = tile

    params_fc = pltpu.CompilerParams(
        dimension_semantics=("parallel", "parallel"),
        vmem_limit_bytes=_VMEM_LIMIT_BYTES)
    params_bmm = pltpu.CompilerParams(
        dimension_semantics=("parallel", "parallel", "arbitrary"),
        vmem_limit_bytes=_VMEM_LIMIT_BYTES)

    # Stage A: y[b, i*tS:(i+1)*tS, :] = x_tile @ W.T + bias   (W, bias resident).
    y_bm = pl.pallas_call(
        _fc_kernel,
        out_shape=jax.ShapeDtypeStruct((B, S, H_out), x_bm.dtype),
        grid_spec=pltpu.PrefetchScalarGridSpec(
            num_scalar_prefetch=0,
            grid=(B, S // tS),
            in_specs=[
                pl.BlockSpec((None, tS, H), lambda b, i: (b, i, 0)),
                pl.BlockSpec((H, H_out), lambda b, i: (0, 0)),      # VMEM-resident
                pl.BlockSpec((1, H_out), lambda b, i: (0, 0)),      # VMEM-resident
            ],
            out_specs=pl.BlockSpec((None, tS, H_out), lambda b, i: (b, i, 0)),
        ),
        compiler_params=params_fc,
    )(x_bm, w_t, b2d)

    # Stage B: out[b, i_tile, :] = sum_t adj[b, i_tile, t_tile] @ y[b, t_tile, :]
    # TODO(synk): bump adj to pipeline_mode=pl.Buffered(3) only if profiling at
    # production scale shows exposed DMA.
    return pl.pallas_call(
        _make_bmm_kernel(is_relu),
        out_shape=jax.ShapeDtypeStruct((B, S, H_out), x_bm.dtype),
        grid_spec=pltpu.PrefetchScalarGridSpec(
            num_scalar_prefetch=0,
            grid=(B, S // tS, S // tT),
            in_specs=[
                pl.BlockSpec((None, tS, tT), lambda b, i, t: (b, i, t)),
                pl.BlockSpec((None, tT, H_out), lambda b, i, t: (b, t, 0)),
            ],
            out_specs=pl.BlockSpec((None, tS, H_out), lambda b, i, t: (b, i, 0)),
            scratch_shapes=[pltpu.VMEM((tS, H_out), jnp.float32)],
        ),
        compiler_params=params_bmm,
    )(adj_bm, y_bm)


# ---------------------------------------------------------------------------
# Wrappers.
# ---------------------------------------------------------------------------
def _pick_tile(S):
    # Prefer tiles that give >= 2 grid steps along S; fall back to a full tile.
    for t in (512, 256, 128):
        if S % t == 0 and S // t >= 2:
            return t
    for t in (512, 256, 128):
        if S % t == 0:
            return t
    return None


def gcn_forward_batch_major(x_bm, adj_bm, w, b, is_relu=True, *,
                            tile=None, force_grid=False):
    """Batch-major entry: x_bm (B,S,H), adj_bm (B,S,S) -> (B,S,H_out).

    Callers that already keep batch-major layouts should use this directly and
    skip the HBM round-trips of the layout transposes in `gcn_forward`.
    """
    B, S, H = x_bm.shape
    H_out = w.shape[0]

    # One-time weight relayout so the MXU consumes it directly (no in-kernel
    # transpose); bias as a 2-D row for clean sublane broadcast.
    w_t = jnp.transpose(w)                      # (H, H_out)
    b2d = b.reshape(1, H_out)
    # TODO(synk): at production scale cast x_bm / w_t (and optionally adj) to
    # bf16 here and keep f32 accumulation via preferred_element_type.

    if tile is None:
        tile = _pick_tile(S)

    itemsize = x_bm.dtype.itemsize
    working_bytes = ((x_bm.size + adj_bm.size + w.size) * itemsize
                     + B * S * H_out * (itemsize + 4))
    use_grid = (tile is not None) and (force_grid or
                                       working_bytes > _SMALL_WORKING_SET_BYTES)

    if not use_grid:
        return _gcn_fused_small(x_bm, adj_bm, w_t, b2d, is_relu)
    return _gcn_gridded(x_bm, adj_bm, w_t, b2d, is_relu, tile)


def gcn_forward(x, adj, w, b, is_relu=True, *, tile=None, force_grid=False):
    """PyTorch-layout entry: x (S,B,H), adj (S,S,B) -> (S,B,H_out)."""
    x_bm = jnp.transpose(x, (1, 0, 2))          # (B, S, H)
    adj_bm = jnp.transpose(adj, (2, 0, 1))      # (B, S, S)
    out_bm = gcn_forward_batch_major(x_bm, adj_bm, w, b, is_relu,
                                     tile=tile, force_grid=force_grid)
    return jnp.transpose(out_bm, (1, 0, 2))     # (S, B, H_out)


def gcn_reference(x, adj, w, b, is_relu=True):
    # Pure-JAX reference mirroring the PyTorch forward exactly.
    out = jnp.einsum('sbh,oh->sbo', x, w) + b                     # fc
    out_p = jnp.transpose(out, (1, 0, 2))                         # (B, S, H_out)
    adj_p = jnp.transpose(adj, (2, 0, 1))                         # (B, S, S)
    z = jnp.einsum('bst,bto->bso', adj_p, out_p)                  # bmm
    z = jnp.transpose(z, (1, 0, 2))                               # (S, B, H_out)
    return jnp.maximum(z, 0.0) if is_relu else z


if __name__ == "__main__":
    key = jax.random.PRNGKey(0)

    def make_inputs(k, S, B, H, H_out):
        kx, ka, kw, kb = jax.random.split(k, 4)
        x = jax.random.normal(kx, (S, B, H), dtype=jnp.float32)
        adj = jax.random.uniform(ka, (S, S, B), dtype=jnp.float32)
        # Deterministic nn.Linear-style init: U(-1/sqrt(fan_in), 1/sqrt(fan_in)).
        bound = 1.0 / (H ** 0.5)
        w = jax.random.uniform(kw, (H_out, H), minval=-bound, maxval=bound,
                               dtype=jnp.float32)
        b = jax.random.uniform(kb, (H_out,), minval=-bound, maxval=bound,
                               dtype=jnp.float32)
        return x, adj, w, b

    k1, k2 = jax.random.split(key)

    # --- Toy shapes from the module (seq=8, batch=2, hidden=32): fused path. ---
    S, B, H = 8, 2, 32
    H_out = H // 2
    x, adj, w, b = make_inputs(k1, S, B, H, H_out)
    for is_relu in (True, False):
        out = jax.block_until_ready(gcn_forward(x, adj, w, b, is_relu=is_relu))
        ref = gcn_reference(x, adj, w, b, is_relu=is_relu)
        assert out.shape == (S, B, H_out), out.shape
        assert jnp.allclose(out, ref, atol=1e-5, rtol=1e-5), \
            f"fused path mismatch (is_relu={is_relu})"

    # --- Larger shapes: exercise the tiled / pipelined grid path. ---
    S2, B2, H2 = 256, 2, 128
    H2_out = H2 // 2
    x2, adj2, w2, b2 = make_inputs(k2, S2, B2, H2, H2_out)
    for is_relu in (True, False):
        out2 = jax.block_until_ready(
            gcn_forward(x2, adj2, w2, b2, is_relu=is_relu,
                        tile=128, force_grid=True))
        ref2 = gcn_reference(x2, adj2, w2, b2, is_relu=is_relu)
        assert out2.shape == (S2, B2, H2_out), out2.shape
        assert jnp.allclose(out2, ref2, atol=1e-3, rtol=1e-3), \
            f"gridded path mismatch (is_relu={is_relu})"

    print("KERNEL_OK")
</pallas_src>

<mosaic_0001>
module attributes {stable_mosaic.version = 11 : i64} {
  func.func @kernel(%arg0: memref<2x8x32xf32, #tpu.memory_space<vmem>>, %arg1: memref<2x8x8xf32, #tpu.memory_space<vmem>>, %arg2: memref<32x16xf32, #tpu.memory_space<vmem>>, %arg3: memref<1x16xf32, #tpu.memory_space<vmem>>, %arg4: memref<2x8x16xf32, #tpu.memory_space<vmem>>) attributes {dimension_semantics = [], scalar_prefetch = 0 : i64, scratch_operands = 0 : i64, tpu.core_type = #tpu.core_type<tc>} {
    %c0 = arith.constant 0 : index
    %c0_0 = arith.constant 0 : index
    %0 = vector.load %arg2[%c0, %c0_0] : memref<32x16xf32, #tpu.memory_space<vmem>>, vector<32x16xf32>
    %1 = vector.shape_cast %0 : vector<32x16xf32> to vector<1x32x16xf32>
    %2 = vector.broadcast %1 : vector<1x32x16xf32> to vector<2x32x16xf32>
    %c0_1 = arith.constant 0 : index
    %c0_2 = arith.constant 0 : index
    %3 = vector.load %arg3[%c0_1, %c0_2] : memref<1x16xf32, #tpu.memory_space<vmem>>, vector<1x16xf32>
    %4 = vector.shape_cast %3 : vector<1x16xf32> to vector<1x1x16xf32>
    %c0_3 = arith.constant 0 : index
    %c0_4 = arith.constant 0 : index
    %c0_5 = arith.constant 0 : index
    %5 = vector.load %arg0[%c0_3, %c0_4, %c0_5] : memref<2x8x32xf32, #tpu.memory_space<vmem>>, vector<2x8x32xf32>
    "tpu.trace_start"() <{level = 10 : i32, message = "bsh,bho->bso"}> : () -> ()
    %cst = arith.constant dense<0.000000e+00> : vector<2x8x16xf32>
    %6 = tpu.matmul %5, %2, %cst {dimension_numbers = #tpu.dot_dimension_numbers<[2], [1], [1], [2], [0, 0, 0, 1, 1, 2], [0], [0]>} : vector<2x8x32xf32>, vector<2x32x16xf32>, vector<2x8x16xf32> -> vector<2x8x16xf32>
    "tpu.trace_stop"() : () -> ()
    %7 = vector.broadcast %4 : vector<1x1x16xf32> to vector<2x8x16xf32>
    %8 = arith.addf %6, %7 : vector<2x8x16xf32>
    %c0_6 = arith.constant 0 : index
    %c0_7 = arith.constant 0 : index
    %c0_8 = arith.constant 0 : index
    %9 = vector.load %arg1[%c0_6, %c0_7, %c0_8] : memref<2x8x8xf32, #tpu.memory_space<vmem>>, vector<2x8x8xf32>
    "tpu.trace_start"() <{level = 10 : i32, message = "bst,bto->bso"}> : () -> ()
    %cst_9 = arith.constant dense<0.000000e+00> : vector<2x8x16xf32>
    %10 = tpu.matmul %9, %8, %cst_9 {dimension_numbers = #tpu.dot_dimension_numbers<[2], [1], [1], [2], [0, 0, 0, 1, 1, 2], [0], [0]>} : vector<2x8x8xf32>, vector<2x8x16xf32>, vector<2x8x16xf32> -> vector<2x8x16xf32>
    "tpu.trace_stop"() : () -> ()
    %cst_10 = arith.constant 0.000000e+00 : f32
    %11 = vector.broadcast %cst_10 : f32 to vector<2x8x16xf32>
    %12 = arith.maximumf %10, %11 : vector<2x8x16xf32>
    %c0_11 = arith.constant 0 : index
    %c0_12 = arith.constant 0 : index
    %c0_13 = arith.constant 0 : index
    %13 = vector.load %arg4[%c0_11, %c0_12, %c0_13] : memref<2x8x16xf32, #tpu.memory_space<vmem>>, vector<2x8x16xf32>
    tpu.vector_store %arg4[%c0_11, %c0_12, %c0_13], %12 {strides = array<i32>} : memref<2x8x16xf32, #tpu.memory_space<vmem>>, vector<2x8x16xf32>,
    return
  }
}

</mosaic_0001>

<llo_original>
// kernel: tpu_custom_call.1
$region0: #{tpu_custom_call.1}
  #allocation0 [shape = 'u32[]', space=smem, size = 0x4, offset = 0x4, fixed_abs, tag = 'smem constant byte address 0x4 - core index']
  #allocation1 [shape = 'u32[144,128]{1,0:T(1,128)}', space=vmem, size = 0x12000, scoped, tag = 'internal scratch']
  %s0 = inlined_call_operand.vmem [shape: f32[2,8,32], index: 0, kind: input, shape index: {}]
  %s1 = inlined_call_operand.vmem [shape: f32[2,8,8], index: 1, kind: input, shape index: {}]
  %s2 = inlined_call_operand.vmem [shape: f32[32,16], index: 2, kind: input, shape index: {}]
  %s3 = inlined_call_operand.vmem [shape: f32[1,16], index: 3, kind: input, shape index: {}]
  %s4 = inlined_call_operand.hbm [shape: f32[2,8,16], index: 4, kind: output, shape index: {}]
  %s5 = sld [smem:[#allocation0]]
  $region26: #{tpu_custom_call.1} parent=0
    _
  %s7 = ssub.s32 1, %s5
  %s8 = scalar_select 0, %s7, %s5
  $region1: #{tpu_custom_call.1} parent=0
    #allocation2 [shape = 'u8[8192]{0}', space=vmem, size = 0x2000, scoped, tag = 'output window, operand 0, single buffered']
    #allocation3 [shape = 's32[1]{0}', space=sflag, size = 0x4, scoped, tag = 'scoped memory for tpu_custom_call.1']
    %9 = vsyncpa [#allocation3], 0
    // Predicated region
    $region2: #{tpu_custom_call.1} parent=1 // pred_check
      _
    $region3: #{tpu_custom_call.1} parent=1 // pred_check_branch
      %11 = sbr.rel (0) target = $region5
    $region4: #{tpu_custom_call.1} parent=1 // pred_region
      _
    $region5: #{tpu_custom_call.1} parent=1 // pred_fallthru
      _
    // Predicated region
    $region6: #{tpu_custom_call.1} parent=1 // pred_check
      _
    $region7: #{tpu_custom_call.1} parent=1 // pred_check_branch
      %13 = sbr.rel (0) target = $region9
    $region8: #{tpu_custom_call.1} parent=1 // pred_region
      _
    $region9: #{tpu_custom_call.1} parent=1 // pred_fallthru
      _
    // Predicated region
    $region10: #{tpu_custom_call.1} parent=1 // pred_check
      _
    $region11: #{tpu_custom_call.1} parent=1 // pred_check_branch
      %15 = sbr.rel (0) target = $region13
    $region12: #{tpu_custom_call.1} parent=1 // pred_region
      _
    $region13: #{tpu_custom_call.1} parent=1 // pred_fallthru
      _
    // Predicated region
    $region14: #{tpu_custom_call.1} parent=1 // pred_check
      _
    $region15: #{tpu_custom_call.1} parent=1 // pred_check_branch
      %17 = sbr.rel (0) target = $region17
    $region16: #{tpu_custom_call.1} parent=1 // pred_region
      _
    $region17: #{tpu_custom_call.1} parent=1 // pred_fallthru
      _
    %v18 = vld [vmem:[%s2] sm:$0xff]
    %v19 = vld [vmem:[%s2 + $0x8] sm:$0xff]
    %v20 = vld [vmem:[%s2 + $0x10] sm:$0xff]
    %v21 = vld [vmem:[%s2 + $0x18] sm:$0xff]
    %v22 = vld [vmem:[%s3] sm:$0x1]
    %v23 = vld [vmem:[%s0] sm:$0xff]
    %v24 = vld [vmem:[%s0 + $0x8] sm:$0xff]
    %v26 = vlaneseq
    %v27 = vshrl.u32 %v26, 7
    %v28 = vsub.s32 0, %v27
    %v29 = vrot.slane %v22, %v28
    %vm31 = vcmask 261120
    %v33 = vsel %vm31, %v23, 0
    %35 = vmatprep.subr.mxu0 0.0
    %36 = vmatpush1.msra.mxu0 %v18
    %37 = vmatprep.subr.mxu0 0.0
    %38 = vmatpush1.msra.mxu0 %v19
    %39 = vmatprep.subr.mxu0 0.0
    %40 = vmatpush1.msra.mxu0 %v20
    %41 = vmatprep.subr.mxu0 0.0
    %42 = vmatpush1.msra.mxu0 %v21
    %43 = vmatprep.subr.mxu0 0.0
    %44 = vmatpush1.msra.mxu0 0.0
    %45 = vmatprep.subr.mxu0 0.0
    %46 = vmatpush1.msra.mxu0 0.0
    %47 = vmatprep.subr.mxu0 0.0
    %48 = vmatpush1.msra.mxu0 0.0
    %49 = vmatprep.subr.mxu0 0.0
    %50 = vmatpush1.msra.mxu0 0.0
    %51 = vmatprep.subr.mxu0 0.0
    %52 = vmatpush1.msra.mxu0 0.0
    %53 = vmatprep.subr.mxu0 0.0
    %54 = vmatpush1.msra.mxu0 0.0
    %55 = vmatprep.subr.mxu0 0.0
    %56 = vmatpush1.msra.mxu0 0.0
    %57 = vmatprep.subr.mxu0 0.0
    %58 = vmatpush1.msra.mxu0 0.0
    %59 = vmatprep.subr.mxu0 0.0
    %60 = vmatpush1.msra.mxu0 0.0
    %61 = vmatprep.subr.mxu0 0.0
    %62 = vmatpush1.msra.mxu0 0.0
    %63 = vmatprep.subr.mxu0 0.0
    %64 = vmatpush1.msra.mxu0 0.0
    %65 = vmatprep.subr.mxu0 0.0
    %66 = vmatpush1.msra.mxu0 0.0
    %67 = vmatprep.subr.mxu0 0.0
    %68 = vmatpush1.msra.mxu0 0.0
    %69 = vmatprep.subr.mxu0 0.0
    %70 = vmatpush1.msra.mxu0 0.0
    %71 = vmatprep.subr.mxu0 0.0
    %72 = vmatpush1.msra.mxu0 0.0
    %73 = vmatprep.subr.mxu0 0.0
    %74 = vmatpush1.msra.mxu0 0.0
    %75 = vmatprep.subr.mxu0 0.0
    %76 = vmatpush1.msra.mxu0 0.0
    %77 = vmatprep.subr.mxu0 0.0
    %78 = vmatpush1.msra.mxu0 0.0
    %79 = vmatprep.subr.mxu0 0.0
    %80 = vmatpush1.msra.mxu0 0.0
    %81 = vmatprep.subr.mxu0 0.0
    %82 = vmatpush1.msra.mxu0 0.0
    %83 = vmatprep.subr.mxu0 0.0
    %84 = vmatpush1.msra.mxu0 0.0
    %85 = vmatprep.subr.mxu0 0.0
    %86 = vmatpush1.msra.mxu0 0.0
    %87 = vmatprep.subr.mxu0 0.0
    %88 = vmatpush1.msra.mxu0 0.0
    %89 = vmatprep.subr.mxu0 0.0
    %90 = vmatpush1.msra.mxu0 0.0
    %91 = vmatprep.subr.mxu0 0.0
    %92 = vmatpush1.msra.mxu0 0.0
    %93 = vmatprep.subr.mxu0 0.0
    %94 = vmatpush1.msra.mxu0 0.0
    %95 = vmatprep.subr.mxu0 0.0
    %96 = vmatpush1.msra.mxu0 0.0
    %97 = vmatprep.subr.mxu0 0.0
    %98 = vmatpush1.msra.mxu0 0.0
    %99 = vmatprep.mubr.f32.mxu0 0.0
    %100 = vmatmul.mubr.f32.gmra.mrb[0].mxu0 %v33
    %v101 = vpop.f32.mrb[0].mxu0
    %v102 = vadd.f32 %v29, %v101
    %v103 = vpop.f32.mrb[0].mxu0
    %104 = vdwg.mxu0
    %v106 = vsel %vm31, %v24, 0
    %108 = vmatprep.subr.mxu0 0.0
    %109 = vmatpush1.msra.mxu0 %v18
    %110 = vmatprep.subr.mxu0 0.0
    %111 = vmatpush1.msra.mxu0 %v19
    %112 = vmatprep.subr.mxu0 0.0
    %113 = vmatpush1.msra.mxu0 %v20
    %114 = vmatprep.subr.mxu0 0.0
    %115 = vmatpush1.msra.mxu0 %v21
    %116 = vmatprep.subr.mxu0 0.0
    %117 = vmatpush1.msra.mxu0 0.0
    %118 = vmatprep.subr.mxu0 0.0
    %119 = vmatpush1.msra.mxu0 0.0
    %120 = vmatprep.subr.mxu0 0.0
    %121 = vmatpush1.msra.mxu0 0.0
    %122 = vmatprep.subr.mxu0 0.0
    %123 = vmatpush1.msra.mxu0 0.0
    %124 = vmatprep.subr.mxu0 0.0
    %125 = vmatpush1.msra.mxu0 0.0
    %126 = vmatprep.subr.mxu0 0.0
    %127 = vmatpush1.msra.mxu0 0.0
    %128 = vmatprep.subr.mxu0 0.0
    %129 = vmatpush1.msra.mxu0 0.0
    %130 = vmatprep.subr.mxu0 0.0
    %131 = vmatpush1.msra.mxu0 0.0
    %132 = vmatprep.subr.mxu0 0.0
    %133 = vmatpush1.msra.mxu0 0.0
    %134 = vmatprep.subr.mxu0 0.0
    %135 = vmatpush1.msra.mxu0 0.0
    %136 = vmatprep.subr.mxu0 0.0
    %137 = vmatpush1.msra.mxu0 0.0
    %138 = vmatprep.subr.mxu0 0.0
    %139 = vmatpush1.msra.mxu0 0.0
    %140 = vmatprep.subr.mxu0 0.0
    %141 = vmatpush1.msra.mxu0 0.0
    %142 = vmatprep.subr.mxu0 0.0
    %143 = vmatpush1.msra.mxu0 0.0
    %144 = vmatprep.subr.mxu0 0.0
    %145 = vmatpush1.msra.mxu0 0.0
    %146 = vmatprep.subr.mxu0 0.0
    %147 = vmatpush1.msra.mxu0 0.0
    %148 = vmatprep.subr.mxu0 0.0
    %149 = vmatpush1.msra.mxu0 0.0
    %150 = vmatprep.subr.mxu0 0.0
    %151 = vmatpush1.msra.mxu0 0.0
    %152 = vmatprep.subr.mxu0 0.0
    %153 = vmatpush1.msra.mxu0 0.0
    %154 = vmatprep.subr.mxu0 0.0
    %155 = vmatpush1.msra.mxu0 0.0
    %156 = vmatprep.subr.mxu0 0.0
    %157 = vmatpush1.msra.mxu0 0.0
    %158 = vmatprep.subr.mxu0 0.0
    %159 = vmatpush1.msra.mxu0 0.0
    %160 = vmatprep.subr.mxu0 0.0
    %161 = vmatpush1.msra.mxu0 0.0
    %162 = vmatprep.subr.mxu0 0.0
    %163 = vmatpush1.msra.mxu0 0.0
    %164 = vmatprep.subr.mxu0 0.0
    %165 = vmatpush1.msra.mxu0 0.0
    %166 = vmatprep.subr.mxu0 0.0
    %167 = vmatpush1.msra.mxu0 0.0
    %168 = vmatprep.subr.mxu0 0.0
    %169 = vmatpush1.msra.mxu0 0.0
    %170 = vmatprep.subr.mxu0 0.0
    %171 = vmatpush1.msra.mxu0 0.0
    %172 = vmatprep.mubr.f32.mxu0 0.0
    %173 = vmatmul.mubr.f32.gmra.mrb[0].mxu0 %v106
    %v174 = vpop.f32.mrb[0].mxu0
    %v175 = vadd.f32 %v29, %v174
    %v176 = vpop.f32.mrb[0].mxu0
    %177 = vdwg.mxu0
    %v178 = vld [vmem:[%s1] sm:$0xff]
    %v179 = vld [vmem:[%s1 + $0x8] sm:$0xff]
    %vm180 = vcmask 64512
    %v182 = vsel %vm180, %v178, 0
    %184 = vmatprep.subr.mxu0 0.0
    %185 = vmatpush1.msra.mxu0 %v102
    %186 = vmatprep.subr.mxu0 0.0
    %187 = vmatpush1.msra.mxu0 0.0
    %188 = vmatprep.subr.mxu0 0.0
    %189 = vmatpush1.msra.mxu0 0.0
    %190 = vmatprep.subr.mxu0 0.0
    %191 = vmatpush1.msra.mxu0 0.0
    %192 = vmatprep.subr.mxu0 0.0
    %193 = vmatpush1.msra.mxu0 0.0
    %194 = vmatprep.subr.mxu0 0.0
    %195 = vmatpush1.msra.mxu0 0.0
    %196 = vmatprep.subr.mxu0 0.0
    %197 = vmatpush1.msra.mxu0 0.0
    %198 = vmatprep.subr.mxu0 0.0
    %199 = vmatpush1.msra.mxu0 0.0
    %200 = vmatprep.subr.mxu0 0.0
    %201 = vmatpush1.msra.mxu0 0.0
    %202 = vmatprep.subr.mxu0 0.0
    %203 = vmatpush1.msra.mxu0 0.0
    %204 = vmatprep.subr.mxu0 0.0
    %205 = vmatpush1.msra.mxu0 0.0
    %206 = vmatprep.subr.mxu0 0.0
    %207 = vmatpush1.msra.mxu0 0.0
    %208 = vmatprep.subr.mxu0 0.0
    %209 = vmatpush1.msra.mxu0 0.0
    %210 = vmatprep.subr.mxu0 0.0
    %211 = vmatpush1.msra.mxu0 0.0
    %212 = vmatprep.subr.mxu0 0.0
    %213 = vmatpush1.msra.mxu0 0.0
    %214 = vmatprep.subr.mxu0 0.0
    %215 = vmatpush1.msra.mxu0 0.0
    %216 = vmatprep.subr.mxu0 0.0
    %217 = vmatpush1.msra.mxu0 0.0
    %218 = vmatprep.subr.mxu0 0.0
    %219 = vmatpush1.msra.mxu0 0.0
    %220 = vmatprep.subr.mxu0 0.0
    %221 = vmatpush1.msra.mxu0 0.0
    %222 = vmatprep.subr.mxu0 0.0
    %223 = vmatpush1.msra.mxu0 0.0
    %224 = vmatprep.subr.mxu0 0.0
    %225 = vmatpush1.msra.mxu0 0.0
    %226 = vmatprep.subr.mxu0 0.0
    %227 = vmatpush1.msra.mxu0 0.0
    %228 = vmatprep.subr.mxu0 0.0
    %229 = vmatpush1.msra.mxu0 0.0
    %230 = vmatprep.subr.mxu0 0.0
    %231 = vmatpush1.msra.mxu0 0.0
    %232 = vmatprep.subr.mxu0 0.0
    %233 = vmatpush1.msra.mxu0 0.0
    %234 = vmatprep.subr.mxu0 0.0
    %235 = vmatpush1.msra.mxu0 0.0
    %236 = vmatprep.subr.mxu0 0.0
    %237 = vmatpush1.msra.mxu0 0.0
    %238 = vmatprep.subr.mxu0 0.0
    %239 = vmatpush1.msra.mxu0 0.0
    %240 = vmatprep.subr.mxu0 0.0
    %241 = vmatpush1.msra.mxu0 0.0
    %242 = vmatprep.subr.mxu0 0.0
    %243 = vmatpush1.msra.mxu0 0.0
    %244 = vmatprep.subr.mxu0 0.0
    %245 = vmatpush1.msra.mxu0 0.0
    %246 = vmatprep.subr.mxu0 0.0
    %247 = vmatpush1.msra.mxu0 0.0
    %248 = vmatprep.mubr.f32.mxu0 0.0
    %249 = vmatmul.mubr.f32.gmra.mrb[0].mxu0 %v182
    %v250 = vpop.f32.mrb[0].mxu0
    %v251 = vadd.f32 0.0, %v250
    %v252 = vpop.f32.mrb[0].mxu0
    %253 = vdwg.mxu0
    %v255 = vsel %vm180, %v179, 0
    %257 = vmatprep.subr.mxu0 0.0
    %258 = vmatpush1.msra.mxu0 %v175
    %259 = vmatprep.subr.mxu0 0.0
    %260 = vmatpush1.msra.mxu0 0.0
    %261 = vmatprep.subr.mxu0 0.0
    %262 = vmatpush1.msra.mxu0 0.0
    %263 = vmatprep.subr.mxu0 0.0
    %264 = vmatpush1.msra.mxu0 0.0
    %265 = vmatprep.subr.mxu0 0.0
    %266 = vmatpush1.msra.mxu0 0.0
    %267 = vmatprep.subr.mxu0 0.0
    %268 = vmatpush1.msra.mxu0 0.0
    %269 = vmatprep.subr.mxu0 0.0
    %270 = vmatpush1.msra.mxu0 0.0
    %271 = vmatprep.subr.mxu0 0.0
    %272 = vmatpush1.msra.mxu0 0.0
    %273 = vmatprep.subr.mxu0 0.0
    %274 = vmatpush1.msra.mxu0 0.0
    %275 = vmatprep.subr.mxu0 0.0
    %276 = vmatpush1.msra.mxu0 0.0
    %277 = vmatprep.subr.mxu0 0.0
    %278 = vmatpush1.msra.mxu0 0.0
    %279 = vmatprep.subr.mxu0 0.0
    %280 = vmatpush1.msra.mxu0 0.0
    %281 = vmatprep.subr.mxu0 0.0
    %282 = vmatpush1.msra.mxu0 0.0
    %283 = vmatprep.subr.mxu0 0.0
    %284 = vmatpush1.msra.mxu0 0.0
    %285 = vmatprep.subr.mxu0 0.0
    %286 = vmatpush1.msra.mxu0 0.0
    %287 = vmatprep.subr.mxu0 0.0
    %288 = vmatpush1.msra.mxu0 0.0
    %289 = vmatprep.subr.mxu0 0.0
    %290 = vmatpush1.msra.mxu0 0.0
    %291 = vmatprep.subr.mxu0 0.0
    %292 = vmatpush1.msra.mxu0 0.0
    %293 = vmatprep.subr.mxu0 0.0
    %294 = vmatpush1.msra.mxu0 0.0
    %295 = vmatprep.subr.mxu0 0.0
    %296 = vmatpush1.msra.mxu0 0.0
    %297 = vmatprep.subr.mxu0 0.0
    %298 = vmatpush1.msra.mxu0 0.0
    %299 = vmatprep.subr.mxu0 0.0
    %300 = vmatpush1.msra.mxu0 0.0
    %301 = vmatprep.subr.mxu0 0.0
    %302 = vmatpush1.msra.mxu0 0.0
    %303 = vmatprep.subr.mxu0 0.0
    %304 = vmatpush1.msra.mxu0 0.0
    %305 = vmatprep.subr.mxu0 0.0
    %306 = vmatpush1.msra.mxu0 0.0
    %307 = vmatprep.subr.mxu0 0.0
    %308 = vmatpush1.msra.mxu0 0.0
    %309 = vmatprep.subr.mxu0 0.0
    %310 = vmatpush1.msra.mxu0 0.0
    %311 = vmatprep.subr.mxu0 0.0
    %312 = vmatpush1.msra.mxu0 0.0
    %313 = vmatprep.subr.mxu0 0.0
    %314 = vmatpush1.msra.mxu0 0.0
    %315 = vmatprep.subr.mxu0 0.0
    %316 = vmatpush1.msra.mxu0 0.0
    %317 = vmatprep.subr.mxu0 0.0
    %318 = vmatpush1.msra.mxu0 0.0
    %319 = vmatprep.subr.mxu0 0.0
    %320 = vmatpush1.msra.mxu0 0.0
    %321 = vmatprep.mubr.f32.mxu0 0.0
    %322 = vmatmul.mubr.f32.gmra.mrb[0].mxu0 %v255
    %v323 = vpop.f32.mrb[0].mxu0
    %v324 = vadd.f32 0.0, %v323
    %v325 = vpop.f32.mrb[0].mxu0
    %326 = vdwg.mxu0
    %v327 = vmax.f32 %v251, 0.0
    %v328 = vmax.f32 %v324, 0.0
    %vm329 = vcmask 130048
    %330 = vst.msk [vmem:[#allocation2] sm:$0xff] %vm329, %v327
    %331 = vst.msk [vmem:[#allocation2 + $0x8] sm:$0xff] %vm329, %v328
    // Predicated region
    $region18: #{tpu_custom_call.1} parent=1 // pred_check
      _
    $region19: #{tpu_custom_call.1} parent=1 // pred_check_branch
      %333 = sbr.rel (0) target = $region21
    $region20: #{tpu_custom_call.1} parent=1 // pred_region
      %s335 = ssub.s32 256, 256
      %336 = vsyncadd [#allocation3], %s335
      %s337 = sshll.u32 [#allocation2], 4
      %s338 = int_to_ptr.vmem [resolvable:$true] %s337
      %343 = dma.vmem_to_hbm [thread:$0]  %s338, 256, %s4, [#allocation3], 128, 128, 8
    $region21: #{tpu_custom_call.1} parent=1 // pred_fallthru
      _
    // Predicated region
    $region22: #{tpu_custom_call.1} parent=1 // pred_check
      _
    $region23: #{tpu_custom_call.1} parent=1 // pred_check_branch
      %345 = sbr.rel (0) target = $region25
    $region24: #{tpu_custom_call.1} parent=1 // pred_region
      %346 = dma.done [#allocation3], 256
    $region25: #{tpu_custom_call.1} parent=1 // pred_fallthru
      _
    %347 = vsyncpa [#allocation3], 1

</llo_original>
